<compile_context>
chip_gen: v7x
topology: tpu7x:2x2x1
jax: 0.10.0
libtpu: 0.0.40
codegen_flags: <defaults>
</compile_context>

<pallas_src>
import functools

import jax
import jax.numpy as jnp
from jax.experimental import pallas as pl
from jax.experimental.pallas import tpu as pltpu


FC_OUTPUT_DIM = 64     # per-branch Linear output (true width)
_DP = 128              # per-branch lane-dense padded width
_CP = 128              # combined conv channels: 32 + 48 + 1 bias channel -> 128


# -----------------------------------------------------------------------------
# Fused Pallas kernel: conv(+bias) -> ReLU -> SPoC mean -> 2x Linear(+bias)
#                      -> 2x L2Norm -> ensemble add, both branches in one shot.
# -----------------------------------------------------------------------------
def _ensemble_fused_kernel(patches_ref, wconv_ref, wfc_ref, out_ref, *, batch):
    # 3x3 conv of BOTH branches as one 2-D MXU matmul over im2col rows
    # ([B*HW, Kp](bf16) x [Kp, Cp](bf16) -> f32 accum).  The conv bias rides on
    # the ones column of `patches` (row 27 of wconv).  Fused with the ReLU so
    # no separate [B*HW, Cp] conv temp is materialized.
    act = jnp.maximum(
        jnp.dot(patches_ref[...], wconv_ref[...],
                preferred_element_type=jnp.float32),
        0.0)                                                   # [B*HW, Cp] f32

    # SPoC mean pooling: in-kernel reshape + mean over HW (XLU reduce).
    hw = act.shape[0] // batch
    pooled = jnp.mean(act.reshape(batch, hw, act.shape[1]), axis=1)   # [B, Cp]

    # Both branches' Linear layers as one block-diagonal bf16 matmul; the FC
    # bias rides on the constant-1 bias channel (pooled[:, feat_a+feat_b] == 1).
    feat = jnp.dot(pooled.astype(jnp.bfloat16), wfc_ref[...],
                   preferred_element_type=jnp.float32)          # [B, 2*Dp] f32

    dp = feat.shape[-1] // 2
    f1 = feat[:, :dp]                                           # modelA features
    f2 = feat[:, dp:]                                           # modelB features

    # L2Norm (F.normalize p=2, eps=1e-12): x * rsqrt(max(sum(x^2), eps^2)).
    # Padded lanes 64..127 are exactly zero (zero wfc columns) -> norm unchanged.
    inv1 = jax.lax.rsqrt(
        jnp.maximum(jnp.sum(f1 * f1, axis=-1, keepdims=True), 1e-24))
    inv2 = jax.lax.rsqrt(
        jnp.maximum(jnp.sum(f2 * f2, axis=-1, keepdims=True), 1e-24))

    # Only the ensemble sum is consumed -> single lane-dense [B, 128] store.
    out_ref[...] = f1 * inv1 + f2 * inv2


# -----------------------------------------------------------------------------
# Host-side glue (all fused into one jit with the pallas_call)
# -----------------------------------------------------------------------------
@functools.partial(jax.jit, static_argnums=(3,))
def _ensemble_branches(x, wconv, wfc, fc_output_dim):
    """One fused pallas_call for both branches; returns v = x1 + x2 ([B, 64])."""
    B, C, H, W = x.shape
    HW = H * W
    kp = wconv.shape[0]
    k = C * 9

    # im2col for a 3x3 'same' conv, in bf16 (half-size intermediates), NHWC
    # tap-major layout: patch column index = (dy*3 + dx)*C + c.  Column k is
    # the ones column carrying the folded conv bias; the rest is zero padding.
    xb = jnp.transpose(x, (0, 2, 3, 1)).astype(jnp.bfloat16)    # [B, H, W, C]
    xp = jnp.pad(xb, ((0, 0), (1, 1), (1, 1), (0, 0)))
    taps = [xp[:, dy:dy + H, dx:dx + W, :] for dy in range(3) for dx in range(3)]
    ones = jnp.ones((B, H, W, 1), jnp.bfloat16)
    patches = jnp.concatenate(taps + [ones], axis=-1).reshape(B * HW, k + 1)
    patches = jnp.pad(patches, ((0, 0), (0, kp - (k + 1))))

    out = pl.pallas_call(
        functools.partial(_ensemble_fused_kernel, batch=B),
        out_shape=jax.ShapeDtypeStruct((B, wfc.shape[1] // 2), jnp.float32),
        in_specs=[pl.BlockSpec(memory_space=pltpu.MemorySpace.VMEM)] * 3,
        out_specs=pl.BlockSpec(memory_space=pltpu.MemorySpace.VMEM),
        # TODO(synk): at real backbone resolutions, add a grid over the B*HW
        # rows with dimension_semantics=("parallel",) (v7x: 2 TensorCores,
        # 64 MiB VMEM); at these toy shapes a gridless call is the right call.
    )(patches, wconv, wfc)

    return out[:, :fc_output_dim]                               # slice inside jit


def my_ensemble_forward(x, packed, fc_output_dim=FC_OUTPUT_DIM):
    """MyEnsemble.forward: compute x1, x2, v = x1 + x2; return the input x.

    Returns (x, v): x unchanged (the module's return value) plus v so the
    fused-kernel work stays live without any host sync inside the forward.
    """
    wconv, wfc = packed
    v = _ensemble_branches(x, wconv, wfc, fc_output_dim)
    print(x.shape)                                              # matches print(x.shape)
    return x, v


# -----------------------------------------------------------------------------
# Deterministic parameter construction + packing for the fused kernel
# -----------------------------------------------------------------------------
def make_branch_params(key, c_in, features_dim, fc_output_dim):
    k1, k2, k3, k4 = jax.random.split(key, 4)
    # Conv weight stored as [C_in*9, features_dim] with row index
    # (dy*3 + dx)*C_in + c to match the host im2col tap-major layout.
    wconv = 0.05 * jax.random.normal(k1, (c_in * 9, features_dim), jnp.float32)
    bconv = 0.01 * jax.random.normal(k2, (1, features_dim), jnp.float32)
    wfc = 0.05 * jax.random.normal(k3, (features_dim, fc_output_dim), jnp.float32)
    bfc = 0.01 * jax.random.normal(k4, (1, fc_output_dim), jnp.float32)
    return (wconv, bconv, wfc, bfc)


def pack_ensemble_params(params_a, params_b, *, c_in, feat_a, feat_b, d):
    """Concatenate + zero-pad both branches' weights; fold BOTH bias vectors.

    wconv [Kp, Cp]: rows 0..C*9-1 = conv taps; row C*9 = conv biases (hit by
        the ones column of the patches) and the 1.0 feed of the constant bias
        channel (column feat_a+feat_b) that carries the FC bias.
    wfc [Cp, 2*Dp]: block-diagonal — branch A rows 0:feat_a -> cols 0:d,
        branch B rows feat_a:feat_a+feat_b -> cols Dp:Dp+d; FC biases sit on
        row feat_a+feat_b (whose pooled activation is exactly 1.0).
    """
    wca, bca, wfa, bfa = params_a
    wcb, bcb, wfb, bfb = params_b
    k = c_in * 9                                # 27
    kp = ((k + 1 + 31) // 32) * 32              # 27 taps + ones column -> 32
    cp = _CP                                    # 32 + 48 + 1 bias channel -> 128
    dp = _DP                                    # per-branch fc width 64 -> 128
    bias_ch = feat_a + feat_b                   # constant-1 channel index (80)

    wconv = jnp.zeros((kp, cp), jnp.float32)
    wconv = wconv.at[:k, :feat_a].set(wca)
    wconv = wconv.at[:k, feat_a:feat_a + feat_b].set(wcb)
    wconv = wconv.at[k, :feat_a].set(bca.reshape(-1))                 # conv bias A
    wconv = wconv.at[k, feat_a:feat_a + feat_b].set(bcb.reshape(-1))  # conv bias B
    wconv = wconv.at[k, bias_ch].set(1.0)                             # FC-bias feed
    wconv = wconv.astype(jnp.bfloat16)          # bf16 MXU operand

    wfc = jnp.zeros((cp, 2 * dp), jnp.float32)
    wfc = wfc.at[:feat_a, :d].set(wfa)
    wfc = wfc.at[feat_a:feat_a + feat_b, dp:dp + d].set(wfb)
    wfc = wfc.at[bias_ch, :d].set(bfa.reshape(-1))                    # FC bias A
    wfc = wfc.at[bias_ch, dp:dp + d].set(bfb.reshape(-1))             # FC bias B
    wfc = wfc.astype(jnp.bfloat16)              # bf16 MXU operand

    return (wconv, wfc)


def _reference_branch(x, params):
    """Pure-JAX f32 reference of one stand-in branch (for numerical check)."""
    wconv, bconv, wfc, bfc = params
    B, C, H, W = x.shape
    xp = jnp.pad(jnp.transpose(x, (0, 2, 3, 1)), ((0, 0), (1, 1), (1, 1), (0, 0)))
    taps = [xp[:, dy:dy + H, dx:dx + W, :] for dy in range(3) for dx in range(3)]
    patches = jnp.concatenate(taps, axis=-1).reshape(B * H * W, C * 9)
    act = jnp.maximum(patches @ wconv + bconv, 0.0)
    pooled = jnp.mean(act.reshape(B, H * W, -1), axis=1)
    feat = pooled @ wfc + bfc
    nrm = jnp.maximum(jnp.linalg.norm(feat, axis=-1, keepdims=True), 1e-12)
    return feat / nrm


if __name__ == "__main__":
    key = jax.random.PRNGKey(0)
    kx, ka, kb = jax.random.split(key, 3)

    # Small image-like input, NCHW like PyTorch: batch=2, 3 channels, 16x16.
    B, C, H, W = 2, 3, 16, 16
    x = jax.random.normal(kx, (B, C, H, W), jnp.float32)

    # modelA: alexnet-like stage (features_dim=32); modelB: resnet/vgg-like
    # stage (features_dim=48); both project to fc_output_dim=64 + L2Norm.
    params_a = make_branch_params(ka, c_in=C, features_dim=32,
                                  fc_output_dim=FC_OUTPUT_DIM)
    params_b = make_branch_params(kb, c_in=C, features_dim=48,
                                  fc_output_dim=FC_OUTPUT_DIM)
    packed = pack_ensemble_params(params_a, params_b, c_in=C,
                                  feat_a=32, feat_b=48, d=FC_OUTPUT_DIM)

    out_x, v = my_ensemble_forward(x, packed)
    out_x, v = jax.block_until_ready((out_x, v))

    # Sanity: MyEnsemble returns its input unchanged; the fused add ran.
    assert out_x.shape == x.shape
    assert bool(jnp.allclose(out_x, x))
    assert v.shape == (B, FC_OUTPUT_DIM)
    assert bool(jnp.all(jnp.isfinite(v)))

    # Numerical check vs. a pure-JAX f32 reference of the stand-in module
    # (kernel uses bf16 MXU operands -> loose tolerance).
    v_ref = _reference_branch(x, params_a) + _reference_branch(x, params_b)
    assert bool(jnp.allclose(v, v_ref, rtol=5e-2, atol=5e-2)), (
        float(jnp.max(jnp.abs(v - v_ref))))

    print("KERNEL_OK")
</pallas_src>

<mosaic_0001>
module attributes {stable_mosaic.version = 11 : i64} {
  func.func @_ensemble_fused_kernel(%arg0: memref<512x32xbf16, #tpu.memory_space<vmem>>, %arg1: memref<32x128xbf16, #tpu.memory_space<vmem>>, %arg2: memref<128x256xbf16, #tpu.memory_space<vmem>>, %arg3: memref<2x128xf32, #tpu.memory_space<vmem>>) attributes {dimension_semantics = [], scalar_prefetch = 0 : i64, scratch_operands = 0 : i64, tpu.core_type = #tpu.core_type<tc>} {
    %c0 = arith.constant 0 : index
    %c0_0 = arith.constant 0 : index
    %0 = vector.load %arg0[%c0, %c0_0] : memref<512x32xbf16, #tpu.memory_space<vmem>>, vector<512x32xbf16>
    %c0_1 = arith.constant 0 : index
    %c0_2 = arith.constant 0 : index
    %1 = vector.load %arg1[%c0_1, %c0_2] : memref<32x128xbf16, #tpu.memory_space<vmem>>, vector<32x128xbf16>
    %cst = arith.constant dense<0.000000e+00> : vector<512x128xf32>
    %2 = tpu.matmul %0, %1, %cst {dimension_numbers = #tpu.dot_dimension_numbers<[1], [0], [0], [1], [0, 0, 1, 1], [], []>} : vector<512x32xbf16>, vector<32x128xbf16>, vector<512x128xf32> -> vector<512x128xf32>
    %cst_3 = arith.constant 0.000000e+00 : f32
    %3 = vector.broadcast %cst_3 : f32 to vector<512x128xf32>
    %4 = arith.maximumf %2, %3 : vector<512x128xf32>
    %5 = vector.shape_cast %4 : vector<512x128xf32> to vector<2x256x128xf32>
    %cst_4 = arith.constant dense<0.000000e+00> : vector<2x128xf32>
    %6 = vector.multi_reduction <add>, %5, %cst_4 [1] : vector<2x256x128xf32> to vector<2x128xf32>
    %cst_5 = arith.constant 2.560000e+02 : f32
    %7 = vector.broadcast %cst_5 : f32 to vector<2x128xf32>
    %8 = arith.divf %6, %7 : vector<2x128xf32>
    %9 = arith.truncf %8 : vector<2x128xf32> to vector<2x128xbf16>
    %c0_6 = arith.constant 0 : index
    %c0_7 = arith.constant 0 : index
    %10 = vector.load %arg2[%c0_6, %c0_7] : memref<128x256xbf16, #tpu.memory_space<vmem>>, vector<128x256xbf16>
    %cst_8 = arith.constant dense<0.000000e+00> : vector<2x256xf32>
    %11 = tpu.matmul %9, %10, %cst_8 {dimension_numbers = #tpu.dot_dimension_numbers<[1], [0], [0], [1], [0, 0, 1, 1], [], []>} : vector<2x128xbf16>, vector<128x256xbf16>, vector<2x256xf32> -> vector<2x256xf32>
    %12 = vector.extract_strided_slice %11 {offsets = [0, 0], sizes = [2, 128], strides = [1, 1]} : vector<2x256xf32> to vector<2x128xf32>
    %13 = vector.extract_strided_slice %11 {offsets = [0, 128], sizes = [2, 128], strides = [1, 1]} : vector<2x256xf32> to vector<2x128xf32>
    %14 = arith.mulf %12, %12 : vector<2x128xf32>
    %cst_9 = arith.constant dense<0.000000e+00> : vector<2xf32>
    %15 = vector.multi_reduction <add>, %14, %cst_9 [1] : vector<2x128xf32> to vector<2xf32>
    %16 = vector.shape_cast %15 : vector<2xf32> to vector<2x1xf32>
    %cst_10 = arith.constant 1.000000e-24 : f32
    %17 = vector.broadcast %cst_10 : f32 to vector<2x1xf32>
    %18 = arith.maximumf %16, %17 : vector<2x1xf32>
    %19 = math.rsqrt %18 : vector<2x1xf32>
    %20 = arith.mulf %13, %13 : vector<2x128xf32>
    %cst_11 = arith.constant dense<0.000000e+00> : vector<2xf32>
    %21 = vector.multi_reduction <add>, %20, %cst_11 [1] : vector<2x128xf32> to vector<2xf32>
    %22 = vector.shape_cast %21 : vector<2xf32> to vector<2x1xf32>
    %cst_12 = arith.constant 1.000000e-24 : f32
    %23 = vector.broadcast %cst_12 : f32 to vector<2x1xf32>
    %24 = arith.maximumf %22, %23 : vector<2x1xf32>
    %25 = math.rsqrt %24 : vector<2x1xf32>
    %26 = vector.broadcast %19 : vector<2x1xf32> to vector<2x128xf32>
    %27 = arith.mulf %12, %26 : vector<2x128xf32>
    %28 = vector.broadcast %25 : vector<2x1xf32> to vector<2x128xf32>
    %29 = arith.mulf %13, %28 : vector<2x128xf32>
    %30 = arith.addf %27, %29 : vector<2x128xf32>
    %c0_13 = arith.constant 0 : index
    %c0_14 = arith.constant 0 : index
    %31 = vector.load %arg3[%c0_13, %c0_14] : memref<2x128xf32, #tpu.memory_space<vmem>>, vector<2x128xf32>
    tpu.vector_store %arg3[%c0_13, %c0_14], %30 {strides = array<i32>} : memref<2x128xf32, #tpu.memory_space<vmem>>, vector<2x128xf32>,
    return
  }
}

</mosaic_0001>

<llo_original>
// kernel: _ensemble_branches.1
$region0: #{_ensemble_branches.1}
  #allocation0 [shape = 'u32[]', space=smem, size = 0x4, offset = 0x4, fixed_abs, tag = 'smem constant byte address 0x4 - core index']
  #allocation1 [shape = 'u32[144,128]{1,0:T(1,128)}', space=vmem, size = 0x12000, scoped, tag = 'internal scratch']
  %s0 = inlined_call_operand.vmem [shape: bf16[512,32], index: 0, kind: input, shape index: {}]
  %s1 = inlined_call_operand.vmem [shape: bf16[32,128], index: 1, kind: input, shape index: {}]
  %s2 = inlined_call_operand.vmem [shape: bf16[128,256], index: 2, kind: input, shape index: {}]
  %s3 = inlined_call_operand.hbm [shape: f32[2,128], index: 3, kind: output, shape index: {}]
  %s4 = sld [smem:[#allocation0]]
  $region22: #{_ensemble_branches.1} parent=0
    _
  %s6 = ssub.s32 1, %s4
  %s7 = scalar_select 0, %s6, %s4
  $region1: #{_ensemble_branches.1} parent=0
    #allocation2 [shape = 'u8[1024]{0}', space=vmem, size = 0x400, scoped, tag = 'output window, operand 0, single buffered']
    #allocation3 [shape = 's32[1]{0}', space=sflag, size = 0x4, scoped, tag = 'scoped memory for _ensemble_branches.1']
    %8 = vsyncpa [#allocation3], 0
    // Predicated region
    $region2: #{_ensemble_branches.1} parent=1 // pred_check
      _
    $region3: #{_ensemble_branches.1} parent=1 // pred_check_branch
      %10 = sbr.rel (0) target = $region5
    $region4: #{_ensemble_branches.1} parent=1 // pred_region
      _
    $region5: #{_ensemble_branches.1} parent=1 // pred_fallthru
      _
    // Predicated region
    $region6: #{_ensemble_branches.1} parent=1 // pred_check
      _
    $region7: #{_ensemble_branches.1} parent=1 // pred_check_branch
      %12 = sbr.rel (0) target = $region9
    $region8: #{_ensemble_branches.1} parent=1 // pred_region
      _
    $region9: #{_ensemble_branches.1} parent=1 // pred_fallthru
      _
    // Predicated region
    $region10: #{_ensemble_branches.1} parent=1 // pred_check
      _
    $region11: #{_ensemble_branches.1} parent=1 // pred_check_branch
      %14 = sbr.rel (0) target = $region13
    $region12: #{_ensemble_branches.1} parent=1 // pred_region
      _
    $region13: #{_ensemble_branches.1} parent=1 // pred_fallthru
      _
    %v16 = vld [vmem:[%s0] sm:$0xf]
    %v17 = vld [vmem:[%s0 + $0x4] sm:$0xf]
    %v18 = vld [vmem:[%s0 + $0x8] sm:$0xf]
    %v19 = vld [vmem:[%s0 + $0xc] sm:$0xf]
    %v20 = vld [vmem:[%s0 + $0x10] sm:$0xf]
    %v21 = vld [vmem:[%s0 + $0x14] sm:$0xf]
    %v22 = vld [vmem:[%s0 + $0x18] sm:$0xf]
    %v23 = vld [vmem:[%s0 + $0x1c] sm:$0xf]
    %v24 = vld [vmem:[%s0 + $0x20] sm:$0xf]
    %v25 = vld [vmem:[%s0 + $0x24] sm:$0xf]
    %v26 = vld [vmem:[%s0 + $0x28] sm:$0xf]
    %v27 = vld [vmem:[%s0 + $0x2c] sm:$0xf]
    %v28 = vld [vmem:[%s0 + $0x30] sm:$0xf]
    %v29 = vld [vmem:[%s0 + $0x34] sm:$0xf]
    %v30 = vld [vmem:[%s0 + $0x38] sm:$0xf]
    %v31 = vld [vmem:[%s0 + $0x3c] sm:$0xf]
    %v32 = vld [vmem:[%s0 + $0x40] sm:$0xf]
    %v33 = vld [vmem:[%s0 + $0x44] sm:$0xf]
    %v34 = vld [vmem:[%s0 + $0x48] sm:$0xf]
    %v35 = vld [vmem:[%s0 + $0x4c] sm:$0xf]
    %v36 = vld [vmem:[%s0 + $0x50] sm:$0xf]
    %v37 = vld [vmem:[%s0 + $0x54] sm:$0xf]
    %v38 = vld [vmem:[%s0 + $0x58] sm:$0xf]
    %v39 = vld [vmem:[%s0 + $0x5c] sm:$0xf]
    %v40 = vld [vmem:[%s0 + $0x60] sm:$0xf]
    %v41 = vld [vmem:[%s0 + $0x64] sm:$0xf]
    %v42 = vld [vmem:[%s0 + $0x68] sm:$0xf]
    %v43 = vld [vmem:[%s0 + $0x6c] sm:$0xf]
    %v44 = vld [vmem:[%s0 + $0x70] sm:$0xf]
    %v45 = vld [vmem:[%s0 + $0x74] sm:$0xf]
    %v46 = vld [vmem:[%s0 + $0x78] sm:$0xf]
    %v47 = vld [vmem:[%s0 + $0x7c] sm:$0xf]
    %v48 = vld [vmem:[%s0 + $0x80] sm:$0xf]
    %v49 = vld [vmem:[%s0 + $0x84] sm:$0xf]
    %v50 = vld [vmem:[%s0 + $0x88] sm:$0xf]
    %v51 = vld [vmem:[%s0 + $0x8c] sm:$0xf]
    %v52 = vld [vmem:[%s0 + $0x90] sm:$0xf]
    %v53 = vld [vmem:[%s0 + $0x94] sm:$0xf]
    %v54 = vld [vmem:[%s0 + $0x98] sm:$0xf]
    %v55 = vld [vmem:[%s0 + $0x9c] sm:$0xf]
    %v56 = vld [vmem:[%s0 + $0xa0] sm:$0xf]
    %v57 = vld [vmem:[%s0 + $0xa4] sm:$0xf]
    %v58 = vld [vmem:[%s0 + $0xa8] sm:$0xf]
    %v59 = vld [vmem:[%s0 + $0xac] sm:$0xf]
    %v60 = vld [vmem:[%s0 + $0xb0] sm:$0xf]
    %v61 = vld [vmem:[%s0 + $0xb4] sm:$0xf]
    %v62 = vld [vmem:[%s0 + $0xb8] sm:$0xf]
    %v63 = vld [vmem:[%s0 + $0xbc] sm:$0xf]
    %v64 = vld [vmem:[%s0 + $0xc0] sm:$0xf]
    %v65 = vld [vmem:[%s0 + $0xc4] sm:$0xf]
    %v66 = vld [vmem:[%s0 + $0xc8] sm:$0xf]
    %v67 = vld [vmem:[%s0 + $0xcc] sm:$0xf]
    %v68 = vld [vmem:[%s0 + $0xd0] sm:$0xf]
    %v69 = vld [vmem:[%s0 + $0xd4] sm:$0xf]
    %v70 = vld [vmem:[%s0 + $0xd8] sm:$0xf]
    %v71 = vld [vmem:[%s0 + $0xdc] sm:$0xf]
    %v72 = vld [vmem:[%s0 + $0xe0] sm:$0xf]
    %v73 = vld [vmem:[%s0 + $0xe4] sm:$0xf]
    %v74 = vld [vmem:[%s0 + $0xe8] sm:$0xf]
    %v75 = vld [vmem:[%s0 + $0xec] sm:$0xf]
    %v76 = vld [vmem:[%s0 + $0xf0] sm:$0xf]
    %v77 = vld [vmem:[%s0 + $0xf4] sm:$0xf]
    %v78 = vld [vmem:[%s0 + $0xf8] sm:$0xf]
    %v79 = vld [vmem:[%s0 + $0xfc] sm:$0xf]
    %v80 = vld [vmem:[%s1] sm:$0xf]
    %v81 = vld [vmem:[%s1 + $0x4] sm:$0xf]
    %v82 = vld [vmem:[%s1 + $0x8] sm:$0xf]
    %v83 = vld [vmem:[%s1 + $0xc] sm:$0xf]
    %v148 = vunpack.c.l.b16 %v16
    %v149 = vunpack.c.l.b16 %v17
    %v150 = vunpack.c.l.b16 %v18
    %v151 = vunpack.c.l.b16 %v19
    %v152 = vunpack.c.l.b16 %v20
    %v153 = vunpack.c.l.b16 %v21
    %v154 = vunpack.c.l.b16 %v22
    %v155 = vunpack.c.l.b16 %v23
    %v156 = vunpack.c.l.b16 %v24
    %v157 = vunpack.c.l.b16 %v25
    %v158 = vunpack.c.l.b16 %v26
    %v159 = vunpack.c.l.b16 %v27
    %v160 = vunpack.c.l.b16 %v28
    %v161 = vunpack.c.l.b16 %v29
    %v162 = vunpack.c.l.b16 %v30
    %v163 = vunpack.c.l.b16 %v31
    %v164 = vunpack.c.l.b16 %v32
    %v165 = vunpack.c.l.b16 %v33
    %v166 = vunpack.c.l.b16 %v34
    %v167 = vunpack.c.l.b16 %v35
    %v168 = vunpack.c.l.b16 %v36
    %v169 = vunpack.c.l.b16 %v37
    %v170 = vunpack.c.l.b16 %v38
    %v171 = vunpack.c.l.b16 %v39
    %v172 = vunpack.c.l.b16 %v40
    %v173 = vunpack.c.l.b16 %v41
    %v174 = vunpack.c.l.b16 %v42
    %v175 = vunpack.c.l.b16 %v43
    %v176 = vunpack.c.l.b16 %v44
    %v177 = vunpack.c.l.b16 %v45
    %v178 = vunpack.c.l.b16 %v46
    %v179 = vunpack.c.l.b16 %v47
    %v180 = vunpack.c.l.b16 %v48
    %v181 = vunpack.c.l.b16 %v49
    %v182 = vunpack.c.l.b16 %v50
    %v183 = vunpack.c.l.b16 %v51
    %v184 = vunpack.c.l.b16 %v52
    %v185 = vunpack.c.l.b16 %v53
    %v186 = vunpack.c.l.b16 %v54
    %v187 = vunpack.c.l.b16 %v55
    %v188 = vunpack.c.l.b16 %v56
    %v189 = vunpack.c.l.b16 %v57
    %v190 = vunpack.c.l.b16 %v58
    %v191 = vunpack.c.l.b16 %v59
    %v192 = vunpack.c.l.b16 %v60
    %v193 = vunpack.c.l.b16 %v61
    %v194 = vunpack.c.l.b16 %v62
    %v195 = vunpack.c.l.b16 %v63
    %v196 = vunpack.c.l.b16 %v64
    %v197 = vunpack.c.l.b16 %v65
    %v198 = vunpack.c.l.b16 %v66
    %v199 = vunpack.c.l.b16 %v67
    %v200 = vunpack.c.l.b16 %v68
    %v201 = vunpack.c.l.b16 %v69
    %v202 = vunpack.c.l.b16 %v70
    %v203 = vunpack.c.l.b16 %v71
    %v204 = vunpack.c.l.b16 %v72
    %v205 = vunpack.c.l.b16 %v73
    %v206 = vunpack.c.l.b16 %v74
    %v207 = vunpack.c.l.b16 %v75
    %v208 = vunpack.c.l.b16 %v76
    %v209 = vunpack.c.l.b16 %v77
    %v210 = vunpack.c.l.b16 %v78
    %v211 = vunpack.c.l.b16 %v79
    %v212 = vpack.c.b16 %v149, %v148
    %v213 = vpack.c.b16 %v151, %v150
    %v214 = vpack.c.b16 %v153, %v152
    %v215 = vpack.c.b16 %v155, %v154
    %v216 = vpack.c.b16 %v157, %v156
    %v217 = vpack.c.b16 %v159, %v158
    %v218 = vpack.c.b16 %v161, %v160
    %v219 = vpack.c.b16 %v163, %v162
    %v220 = vpack.c.b16 %v165, %v164
    %v221 = vpack.c.b16 %v167, %v166
    %v222 = vpack.c.b16 %v169, %v168
    %v223 = vpack.c.b16 %v171, %v170
    %v224 = vpack.c.b16 %v173, %v172
    %v225 = vpack.c.b16 %v175, %v174
    %v226 = vpack.c.b16 %v177, %v176
    %v227 = vpack.c.b16 %v179, %v178
    %v228 = vpack.c.b16 %v181, %v180
    %v229 = vpack.c.b16 %v183, %v182
    %v230 = vpack.c.b16 %v185, %v184
    %v231 = vpack.c.b16 %v187, %v186
    %v232 = vpack.c.b16 %v189, %v188
    %v233 = vpack.c.b16 %v191, %v190
    %v234 = vpack.c.b16 %v193, %v192
    %v235 = vpack.c.b16 %v195, %v194
    %v236 = vpack.c.b16 %v197, %v196
    %v237 = vpack.c.b16 %v199, %v198
    %v238 = vpack.c.b16 %v201, %v200
    %v239 = vpack.c.b16 %v203, %v202
    %v240 = vpack.c.b16 %v205, %v204
    %v241 = vpack.c.b16 %v207, %v206
    %v242 = vpack.c.b16 %v209, %v208
    %v243 = vpack.c.b16 %v211, %v210
    %v248 = vunpack.c.l.b16 %v80
    %v249 = vunpack.c.l.b16 %v81
    %v250 = vunpack.c.l.b16 %v82
    %v251 = vunpack.c.l.b16 %v83
    %v252 = vpack.c.b16 %v249, %v248
    %v253 = vpack.c.b16 %v251, %v250
    %vm256 = vcmask 261120
    %v258 = vsel %vm256, %v212, 0
    %v261 = vsel %vm256, %v213, 0
    %v264 = vsel %vm256, %v214, 0
    %v267 = vsel %vm256, %v215, 0
    %v270 = vsel %vm256, %v216, 0
    %v273 = vsel %vm256, %v217, 0
    %v276 = vsel %vm256, %v218, 0
    %v279 = vsel %vm256, %v219, 0
    %v282 = vsel %vm256, %v220, 0
    %v285 = vsel %vm256, %v221, 0
    %v288 = vsel %vm256, %v222, 0
    %v291 = vsel %vm256, %v223, 0
    %v294 = vsel %vm256, %v224, 0
    %v297 = vsel %vm256, %v225, 0
    %v300 = vsel %vm256, %v226, 0
    %v303 = vsel %vm256, %v227, 0
    %v306 = vsel %vm256, %v228, 0
    %v309 = vsel %vm256, %v229, 0
    %v312 = vsel %vm256, %v230, 0
    %v315 = vsel %vm256, %v231, 0
    %v318 = vsel %vm256, %v232, 0
    %v321 = vsel %vm256, %v233, 0
    %v324 = vsel %vm256, %v234, 0
    %v327 = vsel %vm256, %v235, 0
    %v330 = vsel %vm256, %v236, 0
    %v333 = vsel %vm256, %v237, 0
    %v336 = vsel %vm256, %v238, 0
    %v339 = vsel %vm256, %v239, 0
    %v342 = vsel %vm256, %v240, 0
    %v345 = vsel %vm256, %v241, 0
    %v348 = vsel %vm256, %v242, 0
    %v351 = vsel %vm256, %v243, 0
    %353 = vmatprep.subr.bf16.mxu0 0
    %354 = vmatpush1.bf16.msra.mxu0 %v252
    %355 = vmatprep.subr.bf16.mxu0 0
    %356 = vmatpush1.bf16.msra.mxu0 %v253
    %357 = vmatprep.subr.bf16.mxu0 0
    %358 = vmatpush1.bf16.msra.mxu0 0
    %359 = vmatprep.subr.bf16.mxu0 0
    %360 = vmatpush1.bf16.msra.mxu0 0
    %361 = vmatprep.subr.bf16.mxu0 0
    %362 = vmatpush1.bf16.msra.mxu0 0
    %363 = vmatprep.subr.bf16.mxu0 0
    %364 = vmatpush1.bf16.msra.mxu0 0
    %365 = vmatprep.subr.bf16.mxu0 0
    %366 = vmatpush1.bf16.msra.mxu0 0
    %367 = vmatprep.subr.bf16.mxu0 0
    %368 = vmatpush1.bf16.msra.mxu0 0
    %369 = vmatprep.subr.bf16.mxu0 0
    %370 = vmatpush1.bf16.msra.mxu0 0
    %371 = vmatprep.subr.bf16.mxu0 0
    %372 = vmatpush1.bf16.msra.mxu0 0
    %373 = vmatprep.subr.bf16.mxu0 0
    %374 = vmatpush1.bf16.msra.mxu0 0
    %375 = vmatprep.subr.bf16.mxu0 0
    %376 = vmatpush1.bf16.msra.mxu0 0
    %377 = vmatprep.subr.bf16.mxu0 0
    %378 = vmatpush1.bf16.msra.mxu0 0
    %379 = vmatprep.subr.bf16.mxu0 0
    %380 = vmatpush1.bf16.msra.mxu0 0
    %381 = vmatprep.subr.bf16.mxu0 0
    %382 = vmatpush1.bf16.msra.mxu0 0
    %383 = vmatprep.subr.bf16.mxu0 0
    %384 = vmatpush1.bf16.msra.mxu0 0
    %385 = vmatprep.mubr.bf16.mxu0 0
    %386 = vmatmul.mubr.bf16.gmra.mrb[0].mxu0 %v258
    %v387 = vpop.f32.mrb[0].mxu0
    %v388 = vadd.f32 0.0, %v387
    %v389 = vpop.f32.mrb[0].mxu0
    %v390 = vpop.f32.mrb[0].mxu0
    %v391 = vadd.f32 0.0, %v390
    %v392 = vpop.f32.mrb[0].mxu0
    %393 = vmatprep.mubr.bf16.mxu0 0
    %394 = vmatmul.mubr.bf16.gmra.mrb[0].mxu0 %v261
    %v395 = vpop.f32.mrb[0].mxu0
    %v396 = vadd.f32 0.0, %v395
    %v397 = vpop.f32.mrb[0].mxu0
    %v398 = vpop.f32.mrb[0].mxu0
    %v399 = vadd.f32 0.0, %v398
    %v400 = vpop.f32.mrb[0].mxu0
    %401 = vmatprep.mubr.bf16.mxu0 0
    %402 = vmatmul.mubr.bf16.gmra.mrb[0].mxu0 %v264
    %v403 = vpop.f32.mrb[0].mxu0
    %v404 = vadd.f32 0.0, %v403
    %v405 = vpop.f32.mrb[0].mxu0
    %v406 = vpop.f32.mrb[0].mxu0
    %v407 = vadd.f32 0.0, %v406
    %v408 = vpop.f32.mrb[0].mxu0
    %409 = vmatprep.mubr.bf16.mxu0 0
    %410 = vmatmul.mubr.bf16.gmra.mrb[0].mxu0 %v267
    %v411 = vpop.f32.mrb[0].mxu0
    %v412 = vadd.f32 0.0, %v411
    %v413 = vpop.f32.mrb[0].mxu0
    %v414 = vpop.f32.mrb[0].mxu0
    %v415 = vadd.f32 0.0, %v414
    %v416 = vpop.f32.mrb[0].mxu0
    %417 = vmatprep.mubr.bf16.mxu0 0
    %418 = vmatmul.mubr.bf16.gmra.mrb[0].mxu0 %v270
    %v419 = vpop.f32.mrb[0].mxu0
    %v420 = vadd.f32 0.0, %v419
    %v421 = vpop.f32.mrb[0].mxu0
    %v422 = vpop.f32.mrb[0].mxu0
    %v423 = vadd.f32 0.0, %v422
    %v424 = vpop.f32.mrb[0].mxu0
    %425 = vmatprep.mubr.bf16.mxu0 0
    %426 = vmatmul.mubr.bf16.gmra.mrb[0].mxu0 %v273
    %v427 = vpop.f32.mrb[0].mxu0
    %v428 = vadd.f32 0.0, %v427
    %v429 = vpop.f32.mrb[0].mxu0
    %v430 = vpop.f32.mrb[0].mxu0
    %v431 = vadd.f32 0.0, %v430
    %v432 = vpop.f32.mrb[0].mxu0
    %433 = vmatprep.mubr.bf16.mxu0 0
    %434 = vmatmul.mubr.bf16.gmra.mrb[0].mxu0 %v276
    %v435 = vpop.f32.mrb[0].mxu0
    %v436 = vadd.f32 0.0, %v435
    %v437 = vpop.f32.mrb[0].mxu0
    %v438 = vpop.f32.mrb[0].mxu0
    %v439 = vadd.f32 0.0, %v438
    %v440 = vpop.f32.mrb[0].mxu0
    %441 = vmatprep.mubr.bf16.mxu0 0
    %442 = vmatmul.mubr.bf16.gmra.mrb[0].mxu0 %v279
    %v443 = vpop.f32.mrb[0].mxu0
    %v444 = vadd.f32 0.0, %v443
    %v445 = vpop.f32.mrb[0].mxu0
    %v446 = vpop.f32.mrb[0].mxu0
    %v447 = vadd.f32 0.0, %v446
    %v448 = vpop.f32.mrb[0].mxu0
    %449 = vmatprep.mubr.bf16.mxu0 0
    %450 = vmatmul.mubr.bf16.gmra.mrb[0].mxu0 %v282
    %v451 = vpop.f32.mrb[0].mxu0
    %v452 = vadd.f32 0.0, %v451
    %v453 = vpop.f32.mrb[0].mxu0
    %v454 = vpop.f32.mrb[0].mxu0
    %v455 = vadd.f32 0.0, %v454
    %v456 = vpop.f32.mrb[0].mxu0
    %457 = vmatprep.mubr.bf16.mxu0 0
    %458 = vmatmul.mubr.bf16.gmra.mrb[0].mxu0 %v285
    %v459 = vpop.f32.mrb[0].mxu0
    %v460 = vadd.f32 0.0, %v459
    %v461 = vpop.f32.mrb[0].mxu0
    %v462 = vpop.f32.mrb[0].mxu0
    %v463 = vadd.f32 0.0, %v462
    %v464 = vpop.f32.mrb[0].mxu0
    %465 = vmatprep.mubr.bf16.mxu0 0
    %466 = vmatmul.mubr.bf16.gmra.mrb[0].mxu0 %v288
    %v467 = vpop.f32.mrb[0].mxu0
    %v468 = vadd.f32 0.0, %v467
    %v469 = vpop.f32.mrb[0].mxu0
    %v470 = vpop.f32.mrb[0].mxu0
    %v471 = vadd.f32 0.0, %v470
    %v472 = vpop.f32.mrb[0].mxu0
    %473 = vmatprep.mubr.bf16.mxu0 0
    %474 = vmatmul.mubr.bf16.gmra.mrb[0].mxu0 %v291
    %v475 = vpop.f32.mrb[0].mxu0
    %v476 = vadd.f32 0.0, %v475
    %v477 = vpop.f32.mrb[0].mxu0
    %v478 = vpop.f32.mrb[0].mxu0
    %v479 = vadd.f32 0.0, %v478
    %v480 = vpop.f32.mrb[0].mxu0
    %481 = vmatprep.mubr.bf16.mxu0 0
    %482 = vmatmul.mubr.bf16.gmra.mrb[0].mxu0 %v294
    %v483 = vpop.f32.mrb[0].mxu0
    %v484 = vadd.f32 0.0, %v483
    %v485 = vpop.f32.mrb[0].mxu0
    %v486 = vpop.f32.mrb[0].mxu0
    %v487 = vadd.f32 0.0, %v486
    %v488 = vpop.f32.mrb[0].mxu0
    %489 = vmatprep.mubr.bf16.mxu0 0
    %490 = vmatmul.mubr.bf16.gmra.mrb[0].mxu0 %v297
    %v491 = vpop.f32.mrb[0].mxu0
    %v492 = vadd.f32 0.0, %v491
    %v493 = vpop.f32.mrb[0].mxu0
    %v494 = vpop.f32.mrb[0].mxu0
    %v495 = vadd.f32 0.0, %v494
    %v496 = vpop.f32.mrb[0].mxu0
    %497 = vmatprep.mubr.bf16.mxu0 0
    %498 = vmatmul.mubr.bf16.gmra.mrb[0].mxu0 %v300
    %v499 = vpop.f32.mrb[0].mxu0
    %v500 = vadd.f32 0.0, %v499
    %v501 = vpop.f32.mrb[0].mxu0
    %v502 = vpop.f32.mrb[0].mxu0
    %v503 = vadd.f32 0.0, %v502
    %v504 = vpop.f32.mrb[0].mxu0
    %505 = vmatprep.mubr.bf16.mxu0 0
    %506 = vmatmul.mubr.bf16.gmra.mrb[0].mxu0 %v303
    %v507 = vpop.f32.mrb[0].mxu0
    %v508 = vadd.f32 0.0, %v507
    %v509 = vpop.f32.mrb[0].mxu0
    %v510 = vpop.f32.mrb[0].mxu0
    %v511 = vadd.f32 0.0, %v510
    %v512 = vpop.f32.mrb[0].mxu0
    %513 = vmatprep.mubr.bf16.mxu0 0
    %514 = vmatmul.mubr.bf16.gmra.mrb[0].mxu0 %v306
    %v515 = vpop.f32.mrb[0].mxu0
    %v516 = vadd.f32 0.0, %v515
    %v517 = vpop.f32.mrb[0].mxu0
    %v518 = vpop.f32.mrb[0].mxu0
    %v519 = vadd.f32 0.0, %v518
    %v520 = vpop.f32.mrb[0].mxu0
    %521 = vmatprep.mubr.bf16.mxu0 0
    %522 = vmatmul.mubr.bf16.gmra.mrb[0].mxu0 %v309
    %v523 = vpop.f32.mrb[0].mxu0
    %v524 = vadd.f32 0.0, %v523
    %v525 = vpop.f32.mrb[0].mxu0
    %v526 = vpop.f32.mrb[0].mxu0
    %v527 = vadd.f32 0.0, %v526
    %v528 = vpop.f32.mrb[0].mxu0
    %529 = vmatprep.mubr.bf16.mxu0 0
    %530 = vmatmul.mubr.bf16.gmra.mrb[0].mxu0 %v312
    %v531 = vpop.f32.mrb[0].mxu0
    %v532 = vadd.f32 0.0, %v531
    %v533 = vpop.f32.mrb[0].mxu0
    %v534 = vpop.f32.mrb[0].mxu0
    %v535 = vadd.f32 0.0, %v534
    %v536 = vpop.f32.mrb[0].mxu0
    %537 = vmatprep.mubr.bf16.mxu0 0
    %538 = vmatmul.mubr.bf16.gmra.mrb[0].mxu0 %v315
    %v539 = vpop.f32.mrb[0].mxu0
    %v540 = vadd.f32 0.0, %v539
    %v541 = vpop.f32.mrb[0].mxu0
    %v542 = vpop.f32.mrb[0].mxu0
    %v543 = vadd.f32 0.0, %v542
    %v544 = vpop.f32.mrb[0].mxu0
    %545 = vmatprep.mubr.bf16.mxu0 0
    %546 = vmatmul.mubr.bf16.gmra.mrb[0].mxu0 %v318
    %v547 = vpop.f32.mrb[0].mxu0
    %v548 = vadd.f32 0.0, %v547
    %v549 = vpop.f32.mrb[0].mxu0
    %v550 = vpop.f32.mrb[0].mxu0
    %v551 = vadd.f32 0.0, %v550
    %v552 = vpop.f32.mrb[0].mxu0
    %553 = vmatprep.mubr.bf16.mxu0 0
    %554 = vmatmul.mubr.bf16.gmra.mrb[0].mxu0 %v321
    %v555 = vpop.f32.mrb[0].mxu0
    %v556 = vadd.f32 0.0, %v555
    %v557 = vpop.f32.mrb[0].mxu0
    %v558 = vpop.f32.mrb[0].mxu0
    %v559 = vadd.f32 0.0, %v558
    %v560 = vpop.f32.mrb[0].mxu0
    %561 = vmatprep.mubr.bf16.mxu0 0
    %562 = vmatmul.mubr.bf16.gmra.mrb[0].mxu0 %v324
    %v563 = vpop.f32.mrb[0].mxu0
    %v564 = vadd.f32 0.0, %v563
    %v565 = vpop.f32.mrb[0].mxu0
    %v566 = vpop.f32.mrb[0].mxu0
    %v567 = vadd.f32 0.0, %v566
    %v568 = vpop.f32.mrb[0].mxu0
    %569 = vmatprep.mubr.bf16.mxu0 0
    %570 = vmatmul.mubr.bf16.gmra.mrb[0].mxu0 %v327
    %v571 = vpop.f32.mrb[0].mxu0
    %v572 = vadd.f32 0.0, %v571
    %v573 = vpop.f32.mrb[0].mxu0
    %v574 = vpop.f32.mrb[0].mxu0
    %v575 = vadd.f32 0.0, %v574
    %v576 = vpop.f32.mrb[0].mxu0
    %577 = vmatprep.mubr.bf16.mxu0 0
    %578 = vmatmul.mubr.bf16.gmra.mrb[0].mxu0 %v330
    %v579 = vpop.f32.mrb[0].mxu0
    %v580 = vadd.f32 0.0, %v579
    %v581 = vpop.f32.mrb[0].mxu0
    %v582 = vpop.f32.mrb[0].mxu0
    %v583 = vadd.f32 0.0, %v582
    %v584 = vpop.f32.mrb[0].mxu0
    %585 = vmatprep.mubr.bf16.mxu0 0
    %586 = vmatmul.mubr.bf16.gmra.mrb[0].mxu0 %v333
    %v587 = vpop.f32.mrb[0].mxu0
    %v588 = vadd.f32 0.0, %v587
    %v589 = vpop.f32.mrb[0].mxu0
    %v590 = vpop.f32.mrb[0].mxu0
    %v591 = vadd.f32 0.0, %v590
    %v592 = vpop.f32.mrb[0].mxu0
    %593 = vmatprep.mubr.bf16.mxu0 0
    %594 = vmatmul.mubr.bf16.gmra.mrb[0].mxu0 %v336
    %v595 = vpop.f32.mrb[0].mxu0
    %v596 = vadd.f32 0.0, %v595
    %v597 = vpop.f32.mrb[0].mxu0
    %v598 = vpop.f32.mrb[0].mxu0
    %v599 = vadd.f32 0.0, %v598
    %v600 = vpop.f32.mrb[0].mxu0
    %601 = vmatprep.mubr.bf16.mxu0 0
    %602 = vmatmul.mubr.bf16.gmra.mrb[0].mxu0 %v339
    %v603 = vpop.f32.mrb[0].mxu0
    %v604 = vadd.f32 0.0, %v603
    %v605 = vpop.f32.mrb[0].mxu0
    %v606 = vpop.f32.mrb[0].mxu0
    %v607 = vadd.f32 0.0, %v606
    %v608 = vpop.f32.mrb[0].mxu0
    %609 = vmatprep.mubr.bf16.mxu0 0
    %610 = vmatmul.mubr.bf16.gmra.mrb[0].mxu0 %v342
    %v611 = vpop.f32.mrb[0].mxu0
    %v612 = vadd.f32 0.0, %v611
    %v613 = vpop.f32.mrb[0].mxu0
    %v614 = vpop.f32.mrb[0].mxu0
    %v615 = vadd.f32 0.0, %v614
    %v616 = vpop.f32.mrb[0].mxu0
    %617 = vmatprep.mubr.bf16.mxu0 0
    %618 = vmatmul.mubr.bf16.gmra.mrb[0].mxu0 %v345
    %v619 = vpop.f32.mrb[0].mxu0
    %v620 = vadd.f32 0.0, %v619
    %v621 = vpop.f32.mrb[0].mxu0
    %v622 = vpop.f32.mrb[0].mxu0
    %v623 = vadd.f32 0.0, %v622
    %v624 = vpop.f32.mrb[0].mxu0
    %625 = vmatprep.mubr.bf16.mxu0 0
    %626 = vmatmul.mubr.bf16.gmra.mrb[0].mxu0 %v348
    %v627 = vpop.f32.mrb[0].mxu0
    %v628 = vadd.f32 0.0, %v627
    %v629 = vpop.f32.mrb[0].mxu0
    %v630 = vpop.f32.mrb[0].mxu0
    %v631 = vadd.f32 0.0, %v630
    %v632 = vpop.f32.mrb[0].mxu0
    %633 = vmatprep.mubr.bf16.mxu0 0
    %634 = vmatmul.mubr.bf16.gmra.mrb[0].mxu0 %v351
    %v635 = vpop.f32.mrb[0].mxu0
    %v636 = vadd.f32 0.0, %v635
    %v637 = vpop.f32.mrb[0].mxu0
    %v638 = vpop.f32.mrb[0].mxu0
    %v639 = vadd.f32 0.0, %v638
    %v640 = vpop.f32.mrb[0].mxu0
    %641 = vdwg.mxu0
    %v642 = vmax.f32 %v388, 0.0
    %v643 = vmax.f32 %v391, 0.0
    %v644 = vmax.f32 %v396, 0.0
    %v645 = vmax.f32 %v399, 0.0
    %v646 = vmax.f32 %v404, 0.0
    %v647 = vmax.f32 %v407, 0.0
    %v648 = vmax.f32 %v412, 0.0
    %v649 = vmax.f32 %v415, 0.0
    %v650 = vmax.f32 %v420, 0.0
    %v651 = vmax.f32 %v423, 0.0
    %v652 = vmax.f32 %v428, 0.0
    %v653 = vmax.f32 %v431, 0.0
    %v654 = vmax.f32 %v436, 0.0
    %v655 = vmax.f32 %v439, 0.0
    %v656 = vmax.f32 %v444, 0.0
    %v657 = vmax.f32 %v447, 0.0
    %v658 = vmax.f32 %v452, 0.0
    %v659 = vmax.f32 %v455, 0.0
    %v660 = vmax.f32 %v460, 0.0
    %v661 = vmax.f32 %v463, 0.0
    %v662 = vmax.f32 %v468, 0.0
    %v663 = vmax.f32 %v471, 0.0
    %v664 = vmax.f32 %v476, 0.0
    %v665 = vmax.f32 %v479, 0.0
    %v666 = vmax.f32 %v484, 0.0
    %v667 = vmax.f32 %v487, 0.0
    %v668 = vmax.f32 %v492, 0.0
    %v669 = vmax.f32 %v495, 0.0
    %v670 = vmax.f32 %v500, 0.0
    %v671 = vmax.f32 %v503, 0.0
    %v672 = vmax.f32 %v508, 0.0
    %v673 = vmax.f32 %v511, 0.0
    %v674 = vmax.f32 %v516, 0.0
    %v675 = vmax.f32 %v519, 0.0
    %v676 = vmax.f32 %v524, 0.0
    %v677 = vmax.f32 %v527, 0.0
    %v678 = vmax.f32 %v532, 0.0
    %v679 = vmax.f32 %v535, 0.0
    %v680 = vmax.f32 %v540, 0.0
    %v681 = vmax.f32 %v543, 0.0
    %v682 = vmax.f32 %v548, 0.0
    %v683 = vmax.f32 %v551, 0.0
    %v684 = vmax.f32 %v556, 0.0
    %v685 = vmax.f32 %v559, 0.0
    %v686 = vmax.f32 %v564, 0.0
    %v687 = vmax.f32 %v567, 0.0
    %v688 = vmax.f32 %v572, 0.0
    %v689 = vmax.f32 %v575, 0.0
    %v690 = vmax.f32 %v580, 0.0
    %v691 = vmax.f32 %v583, 0.0
    %v692 = vmax.f32 %v588, 0.0
    %v693 = vmax.f32 %v591, 0.0
    %v694 = vmax.f32 %v596, 0.0
    %v695 = vmax.f32 %v599, 0.0
    %v696 = vmax.f32 %v604, 0.0
    %v697 = vmax.f32 %v607, 0.0
    %v698 = vmax.f32 %v612, 0.0
    %v699 = vmax.f32 %v615, 0.0
    %v700 = vmax.f32 %v620, 0.0
    %v701 = vmax.f32 %v623, 0.0
    %v702 = vmax.f32 %v628, 0.0
    %v703 = vmax.f32 %v631, 0.0
    %v704 = vmax.f32 %v636, 0.0
    %v705 = vmax.f32 %v639, 0.0
    %v706 = vadd.f32 %v642, %v643
    %v707 = vadd.f32 %v706, %v644
    %v708 = vadd.f32 %v707, %v645
    %v709 = vadd.f32 %v708, %v646
    %v710 = vadd.f32 %v709, %v647
    %v711 = vadd.f32 %v710, %v648
    %v712 = vadd.f32 %v711, %v649
    %v713 = vadd.f32 %v712, %v650
    %v714 = vadd.f32 %v713, %v651
    %v715 = vadd.f32 %v714, %v652
    %v716 = vadd.f32 %v715, %v653
    %v717 = vadd.f32 %v716, %v654
    %v718 = vadd.f32 %v717, %v655
    %v719 = vadd.f32 %v718, %v656
    %v720 = vadd.f32 %v719, %v657
    %v721 = vadd.f32 %v720, %v658
    %v722 = vadd.f32 %v721, %v659
    %v723 = vadd.f32 %v722, %v660
    %v724 = vadd.f32 %v723, %v661
    %v725 = vadd.f32 %v724, %v662
    %v726 = vadd.f32 %v725, %v663
    %v727 = vadd.f32 %v726, %v664
    %v728 = vadd.f32 %v727, %v665
    %v729 = vadd.f32 %v728, %v666
    %v730 = vadd.f32 %v729, %v667
    %v731 = vadd.f32 %v730, %v668
    %v732 = vadd.f32 %v731, %v669
    %v733 = vadd.f32 %v732, %v670
    %v734 = vadd.f32 %v733, %v671
    %v735 = vadd.f32 %v734, %v672
    %v736 = vadd.f32 %v735, %v673
    %v737 = vrot.slane %v736, 4
    %v738 = vadd.f32 %v736, %v737
    %v739 = vrot.slane %v738, 2
    %v740 = vadd.f32 %v738, %v739
    %v741 = vrot.slane %v740, 1
    %v742 = vadd.f32 %v740, %v741
    %v743 = vadd.f32 %v674, %v675
    %v744 = vadd.f32 %v743, %v676
    %v745 = vadd.f32 %v744, %v677
    %v746 = vadd.f32 %v745, %v678
    %v747 = vadd.f32 %v746, %v679
    %v748 = vadd.f32 %v747, %v680
    %v749 = vadd.f32 %v748, %v681
    %v750 = vadd.f32 %v749, %v682
    %v751 = vadd.f32 %v750, %v683
    %v752 = vadd.f32 %v751, %v684
    %v753 = vadd.f32 %v752, %v685
    %v754 = vadd.f32 %v753, %v686
    %v755 = vadd.f32 %v754, %v687
    %v756 = vadd.f32 %v755, %v688
    %v757 = vadd.f32 %v756, %v689
    %v758 = vadd.f32 %v757, %v690
    %v759 = vadd.f32 %v758, %v691
    %v760 = vadd.f32 %v759, %v692
    %v761 = vadd.f32 %v760, %v693
    %v762 = vadd.f32 %v761, %v694
    %v763 = vadd.f32 %v762, %v695
    %v764 = vadd.f32 %v763, %v696
    %v765 = vadd.f32 %v764, %v697
    %v766 = vadd.f32 %v765, %v698
    %v767 = vadd.f32 %v766, %v699
    %v768 = vadd.f32 %v767, %v700
    %v769 = vadd.f32 %v768, %v701
    %v770 = vadd.f32 %v769, %v702
    %v771 = vadd.f32 %v770, %v703
    %v772 = vadd.f32 %v771, %v704
    %v773 = vadd.f32 %v772, %v705
    %v774 = vrot.slane %v773, 4
    %v775 = vadd.f32 %v773, %v774
    %v776 = vrot.slane %v775, 2
    %v777 = vadd.f32 %v775, %v776
    %v778 = vrot.slane %v777, 1
    %v779 = vadd.f32 %v777, %v778
    %v780 = vrcp.pop 256.0
    %v781 = vmul.f32 %v742, %v780
    %v782 = vmul.f32 %v779, %v780
    %v783 = vpack.c.bf16 %v781, %v781
    %v784 = vpack.c.bf16 %v782, %v782
    %v785 = vld [vmem:[%s2] sm:$0xff]
    %v786 = vld [vmem:[%s2 + $0x8] sm:$0xff]
    %v787 = vld [vmem:[%s2 + $0x10] sm:$0xff]
    %v788 = vld [vmem:[%s2 + $0x18] sm:$0xff]
    %v789 = vld [vmem:[%s2 + $0x20] sm:$0xff]
    %v790 = vld [vmem:[%s2 + $0x28] sm:$0xff]
    %v791 = vld [vmem:[%s2 + $0x30] sm:$0xff]
    %v792 = vld [vmem:[%s2 + $0x38] sm:$0xff]
    %v793 = vld [vmem:[%s2 + $0x40] sm:$0xff]
    %v794 = vld [vmem:[%s2 + $0x48] sm:$0xff]
    %v795 = vld [vmem:[%s2 + $0x50] sm:$0xff]
    %v796 = vld [vmem:[%s2 + $0x58] sm:$0xff]
    %v797 = vld [vmem:[%s2 + $0x60] sm:$0xff]
    %v798 = vld [vmem:[%s2 + $0x68] sm:$0xff]
    %v799 = vld [vmem:[%s2 + $0x70] sm:$0xff]
    %v800 = vld [vmem:[%s2 + $0x78] sm:$0xff]
    %v803 = vunpack.c.l.b16 %v783
    %v804 = vunpack.c.l.b16 %v784
    %vm805 = vcmask 1041409
    %v806 = vsel %vm805, %v804, %v803
    %v807 = vpack.c.b16 %v806, %v806
    %v825 = vunpack.c.l.b16 %v785
    %v826 = vunpack.c.h.b16 %v785
    %v827 = vunpack.c.l.b16 %v786
    %v828 = vunpack.c.h.b16 %v786
    %v829 = vunpack.c.l.b16 %v787
    %v830 = vunpack.c.h.b16 %v787
    %v831 = vunpack.c.l.b16 %v788
    %v832 = vunpack.c.h.b16 %v788
    %v833 = vunpack.c.l.b16 %v789
    %v834 = vunpack.c.h.b16 %v789
    %v835 = vunpack.c.l.b16 %v790
    %v836 = vunpack.c.h.b16 %v790
    %v837 = vunpack.c.l.b16 %v791
    %v838 = vunpack.c.h.b16 %v791
    %v839 = vunpack.c.l.b16 %v792
    %v840 = vunpack.c.h.b16 %v792
    %v841 = vunpack.c.l.b16 %v793
    %v842 = vunpack.c.h.b16 %v793
    %v843 = vunpack.c.l.b16 %v794
    %v844 = vunpack.c.h.b16 %v794
    %v845 = vunpack.c.l.b16 %v795
    %v846 = vunpack.c.h.b16 %v795
    %v847 = vunpack.c.l.b16 %v796
    %v848 = vunpack.c.h.b16 %v796
    %v849 = vunpack.c.l.b16 %v797
    %v850 = vunpack.c.h.b16 %v797
    %v851 = vunpack.c.l.b16 %v798
    %v852 = vunpack.c.h.b16 %v798
    %v853 = vunpack.c.l.b16 %v799
    %v854 = vunpack.c.h.b16 %v799
    %v855 = vunpack.c.l.b16 %v800
    %v856 = vunpack.c.h.b16 %v800
    %v857 = vpack.c.b16 %v827, %v825
    %v858 = vpack.c.b16 %v828, %v826
    %v859 = vpack.c.b16 %v831, %v829
    %v860 = vpack.c.b16 %v832, %v830
    %v861 = vpack.c.b16 %v835, %v833
    %v862 = vpack.c.b16 %v836, %v834
    %v863 = vpack.c.b16 %v839, %v837
    %v864 = vpack.c.b16 %v840, %v838
    %v865 = vpack.c.b16 %v843, %v841
    %v866 = vpack.c.b16 %v844, %v842
    %v867 = vpack.c.b16 %v847, %v845
    %v868 = vpack.c.b16 %v848, %v846
    %v869 = vpack.c.b16 %v851, %v849
    %v870 = vpack.c.b16 %v852, %v850
    %v871 = vpack.c.b16 %v855, %v853
    %v872 = vpack.c.b16 %v856, %v854
    %889 = vmatprep.subr.bf16.mxu0 %v858
    %890 = vmatpush1.bf16.msra.mxu0 %v857
    %891 = vmatprep.subr.bf16.mxu0 %v860
    %892 = vmatpush1.bf16.msra.mxu0 %v859
    %893 = vmatprep.subr.bf16.mxu0 %v862
    %894 = vmatpush1.bf16.msra.mxu0 %v861
    %895 = vmatprep.subr.bf16.mxu0 %v864
    %896 = vmatpush1.bf16.msra.mxu0 %v863
    %897 = vmatprep.subr.bf16.mxu0 %v866
    %898 = vmatpush1.bf16.msra.mxu0 %v865
    %899 = vmatprep.subr.bf16.mxu0 %v868
    %900 = vmatpush1.bf16.msra.mxu0 %v867
    %901 = vmatprep.subr.bf16.mxu0 %v870
    %902 = vmatpush1.bf16.msra.mxu0 %v869
    %903 = vmatprep.subr.bf16.mxu0 %v872
    %904 = vmatpush1.bf16.msra.mxu0 %v871
    %905 = vmatprep.subr.bf16.mxu0 0
    %906 = vmatpush1.bf16.msra.mxu0 0
    %907 = vmatprep.subr.bf16.mxu0 0
    %908 = vmatpush1.bf16.msra.mxu0 0
    %909 = vmatprep.subr.bf16.mxu0 0
    %910 = vmatpush1.bf16.msra.mxu0 0
    %911 = vmatprep.subr.bf16.mxu0 0
    %912 = vmatpush1.bf16.msra.mxu0 0
    %913 = vmatprep.subr.bf16.mxu0 0
    %914 = vmatpush1.bf16.msra.mxu0 0
    %915 = vmatprep.subr.bf16.mxu0 0
    %916 = vmatpush1.bf16.msra.mxu0 0
    %917 = vmatprep.subr.bf16.mxu0 0
    %918 = vmatpush1.bf16.msra.mxu0 0
    %919 = vmatprep.subr.bf16.mxu0 0
    %920 = vmatpush1.bf16.msra.mxu0 0
    %921 = vmatprep.mubr.bf16.mxu0 0
    %922 = vmatmul.mubr.bf16.gmra.mrb[0].mxu0 %v807
    %v923 = vpop.f32.mrb[0].mxu0
    %v924 = vadd.f32 0.0, %v923
    %v925 = vpop.f32.mrb[0].mxu0
    %v926 = vadd.f32 0.0, %v925
    %v927 = vpop.f32.mrb[0].mxu0
    %v928 = vpop.f32.mrb[0].mxu0
    %929 = vdwg.mxu0
    %v930 = vmul.f32 %v924, %v924
    %vm931 = vcmask 1041408
    %v932 = vsel %vm931, %v930, 0.0
    %933 = vadd.xlane.f32.xlu0 %v932
    %v934 = vpop.xlane.xlu0 %933
    %v935 = vmax.f32 %v934, 1e-24
    %v936 = vrsqrt.pop %v935
    %v937 = vmul.f32 %v926, %v926
    %v938 = vsel %vm931, %v937, 0.0
    %939 = vadd.xlane.f32.xlu0 %v938
    %v940 = vpop.xlane.xlu0 %939
    %v941 = vmax.f32 %v940, 1e-24
    %v942 = vrsqrt.pop %v941
    %v943 = vmul.f32 %v924, %v936
    %v944 = vmul.f32 %v926, %v942
    %v945 = vadd.f32 %v943, %v944
    %946 = vst [vmem:[#allocation2] sm:$0x3] %v945
    // Predicated region
    $region14: #{_ensemble_branches.1} parent=1 // pred_check
      _
    $region15: #{_ensemble_branches.1} parent=1 // pred_check_branch
      %948 = sbr.rel (0) target = $region17
    $region16: #{_ensemble_branches.1} parent=1 // pred_region
      %s950 = ssub.s32 32, 32
      %951 = vsyncadd [#allocation3], %s950
      %s953 = sshll.u32 [#allocation2], 4
      %s954 = int_to_ptr.vmem [resolvable:$true] %s953
      %956 = dma.vmem_to_hbm [thread:$0]  %s954, 32, %s3, [#allocation3]
    $region17: #{_ensemble_branches.1} parent=1 // pred_fallthru
      _
    // Predicated region
    $region18: #{_ensemble_branches.1} parent=1 // pred_check
      _
    $region19: #{_ensemble_branches.1} parent=1 // pred_check_branch
      %958 = sbr.rel (0) target = $region21
    $region20: #{_ensemble_branches.1} parent=1 // pred_region
      %959 = dma.done [#allocation3], 32
    $region21: #{_ensemble_branches.1} parent=1 // pred_fallthru
      _
    %960 = vsyncpa [#allocation3], 1

</llo_original>
